<compile_context>
chip_gen: v7x
topology: tpu7x:2x2x1
jax: 0.10.0
libtpu: 0.0.40
codegen_flags: <defaults>
</compile_context>

<pallas_src>
import math

import jax
import jax.numpy as jnp
from jax.experimental import pallas as pl
from jax.experimental.pallas import tpu as pltpu

TILE_B = 4096  # rows per grid step when B is large (x tile = 12*4096*2B ~ 96 KiB)


def mlp_kernel(x_ref, w1_ref, b1_ref, w2_ref, b2_ref, w3_ref, b3_ref, o_ref):
    # Feature-major: x_ref is (12, TILE_B) bf16; weights are PyTorch layout (out, in) f32.
    x = x_ref[...].astype(jnp.float32)                                     # (12, TB)
    h1 = jnp.dot(w1_ref[...], x, preferred_element_type=jnp.float32)       # (32, TB)
    h1 = jnp.maximum(h1 + b1_ref[...], 0.0)                                # bias (32,1) bcast
    h2 = jnp.dot(w2_ref[...], h1, preferred_element_type=jnp.float32)      # (16, TB)
    h2 = jnp.maximum(h2 + b2_ref[...], 0.0)
    out = jnp.dot(w3_ref[...], h2, preferred_element_type=jnp.float32)     # (3, TB)
    o_ref[...] = (out + b3_ref[...]).astype(o_ref.dtype)


def simple_net_forward(x, params):
    """x: (B, 12) float32 -> (B, 3) float32. Matches nn.Linear semantics y = x @ W^T + b."""
    w1, b1, w2, b2, w3, b3 = params
    B = x.shape[0]

    # Feature-major, bf16 at the boundary (HBM-bandwidth dominated tensor).
    x_fm = x.T.astype(jnp.bfloat16)                                        # (12, B)

    if B <= TILE_B:
        tile_b, b_pad = B, B                    # single full-extent block (no (8,128) issue)
    else:
        tile_b = TILE_B                         # multiple of 128 -> legal lane tiling
        b_pad = pl.cdiv(B, tile_b) * tile_b
        if b_pad != B:
            x_fm = jnp.pad(x_fm, ((0, 0), (0, b_pad - B)))

    grid = (b_pad // tile_b,)

    def const_spec(shape):
        return pl.BlockSpec(shape, lambda i: (0, 0))    # resident weights/biases

    flops = 2 * b_pad * (12 * 32 + 32 * 16 + 16 * 3)
    bytes_accessed = (b_pad * 12 * 2                    # bf16 x in
                      + b_pad * 3 * 4                   # f32 out
                      + sum(int(p.size) * 4 for p in params))

    out_fm = pl.pallas_call(
        mlp_kernel,
        out_shape=jax.ShapeDtypeStruct((3, b_pad), jnp.float32),
        grid=grid,
        in_specs=[
            pl.BlockSpec((12, tile_b), lambda i: (0, i)),   # x tile, pipelined over batch
            const_spec((32, 12)), const_spec((32, 1)),
            const_spec((16, 32)), const_spec((16, 1)),
            const_spec((3, 16)),  const_spec((3, 1)),
        ],
        out_specs=pl.BlockSpec((3, tile_b), lambda i: (0, i)),
        compiler_params=pltpu.CompilerParams(
            dimension_semantics=("parallel",),              # shard batch grid across TCs (v7x)
        ),
        cost_estimate=pl.CostEstimate(
            flops=flops, bytes_accessed=bytes_accessed, transcendentals=0),
    )(x_fm, w1, b1, w2, b2, w3, b3)

    return out_fm.T[:B]                                     # back to (B, 3)


def init_params(key):
    """Deterministic init mimicking PyTorch nn.Linear default (uniform +/- 1/sqrt(fan_in)).
    Weights stored PyTorch-style as (out, in); biases as (out, 1) for feature-major broadcast."""
    dims = [(12, 32), (32, 16), (16, 3)]
    params = []
    for fan_in, fan_out in dims:
        key, kw, kb = jax.random.split(key, 3)
        bound = 1.0 / math.sqrt(fan_in)
        w = jax.random.uniform(kw, (fan_out, fan_in), jnp.float32, -bound, bound)
        b = jax.random.uniform(kb, (fan_out, 1), jnp.float32, -bound, bound)
        params.extend([w, b])
    return tuple(params)


def reference_forward(x, params):
    w1, b1, w2, b2, w3, b3 = params
    h1 = jnp.maximum(x @ w1.T + b1.T, 0.0)
    h2 = jnp.maximum(h1 @ w2.T + b2.T, 0.0)
    return h2 @ w3.T + b3.T


if __name__ == "__main__":
    key = jax.random.PRNGKey(0)
    key, kx = jax.random.split(key)
    x = jax.random.normal(kx, (8, 12), jnp.float32)   # batch=8, in_features=12
    params = init_params(key)

    out = simple_net_forward(x, params)
    out = jax.block_until_ready(out)

    ref = reference_forward(x, params)
    assert out.shape == (8, 3)
    # x is fed to the kernel in bf16 (perf), so allow bf16-level tolerance vs f32 reference.
    assert jnp.allclose(out, ref, atol=2e-2, rtol=2e-2)

    print("KERNEL_OK")
</pallas_src>

<mosaic_0001>
module attributes {stable_mosaic.version = 11 : i64} {
  func.func @mlp_kernel(%arg0: i32, %arg1: memref<12x8xbf16, #tpu.memory_space<vmem>>, %arg2: memref<32x12xf32, #tpu.memory_space<vmem>>, %arg3: memref<32x1xf32, #tpu.memory_space<vmem>>, %arg4: memref<16x32xf32, #tpu.memory_space<vmem>>, %arg5: memref<16x1xf32, #tpu.memory_space<vmem>>, %arg6: memref<3x16xf32, #tpu.memory_space<vmem>>, %arg7: memref<3x1xf32, #tpu.memory_space<vmem>>, %arg8: memref<3x8xf32, #tpu.memory_space<vmem>>) attributes {dimension_semantics = [#tpu.dimension_semantics<parallel>], iteration_bounds = array<i64: 1>, scalar_prefetch = 0 : i64, scratch_operands = 0 : i64, tpu.core_type = #tpu.core_type<tc>, window_params = [{transform_indices = @transform_0, window_bounds = array<i64: 12, 8>}, {pipeline_mode = #tpu.pipeline_mode<synchronous>, transform_indices = @transform_1, window_bounds = array<i64: 32, 12>}, {pipeline_mode = #tpu.pipeline_mode<synchronous>, transform_indices = @transform_2, window_bounds = array<i64: 32, 1>}, {pipeline_mode = #tpu.pipeline_mode<synchronous>, transform_indices = @transform_3, window_bounds = array<i64: 16, 32>}, {pipeline_mode = #tpu.pipeline_mode<synchronous>, transform_indices = @transform_4, window_bounds = array<i64: 16, 1>}, {pipeline_mode = #tpu.pipeline_mode<synchronous>, transform_indices = @transform_5, window_bounds = array<i64: 3, 16>}, {pipeline_mode = #tpu.pipeline_mode<synchronous>, transform_indices = @transform_6, window_bounds = array<i64: 3, 1>}, {transform_indices = @transform_7, window_bounds = array<i64: 3, 8>}]} {
    %c0 = arith.constant 0 : index
    %c0_0 = arith.constant 0 : index
    %0 = vector.load %arg1[%c0, %c0_0] : memref<12x8xbf16, #tpu.memory_space<vmem>>, vector<12x8xbf16>
    %1 = arith.extf %0 : vector<12x8xbf16> to vector<12x8xf32>
    %c0_1 = arith.constant 0 : index
    %c0_2 = arith.constant 0 : index
    %2 = vector.load %arg2[%c0_1, %c0_2] : memref<32x12xf32, #tpu.memory_space<vmem>>, vector<32x12xf32>
    %cst = arith.constant dense<0.000000e+00> : vector<32x8xf32>
    %3 = tpu.matmul %2, %1, %cst {dimension_numbers = #tpu.dot_dimension_numbers<[1], [0], [0], [1], [0, 0, 1, 1], [], []>} : vector<32x12xf32>, vector<12x8xf32>, vector<32x8xf32> -> vector<32x8xf32>
    %c0_3 = arith.constant 0 : index
    %c0_4 = arith.constant 0 : index
    %4 = vector.load %arg3[%c0_3, %c0_4] : memref<32x1xf32, #tpu.memory_space<vmem>>, vector<32x1xf32>
    %5 = vector.broadcast %4 : vector<32x1xf32> to vector<32x8xf32>
    %6 = arith.addf %3, %5 : vector<32x8xf32>
    %cst_5 = arith.constant 0.000000e+00 : f32
    %7 = vector.broadcast %cst_5 : f32 to vector<32x8xf32>
    %8 = arith.maximumf %6, %7 : vector<32x8xf32>
    %c0_6 = arith.constant 0 : index
    %c0_7 = arith.constant 0 : index
    %9 = vector.load %arg4[%c0_6, %c0_7] : memref<16x32xf32, #tpu.memory_space<vmem>>, vector<16x32xf32>
    %cst_8 = arith.constant dense<0.000000e+00> : vector<16x8xf32>
    %10 = tpu.matmul %9, %8, %cst_8 {dimension_numbers = #tpu.dot_dimension_numbers<[1], [0], [0], [1], [0, 0, 1, 1], [], []>} : vector<16x32xf32>, vector<32x8xf32>, vector<16x8xf32> -> vector<16x8xf32>
    %c0_9 = arith.constant 0 : index
    %c0_10 = arith.constant 0 : index
    %11 = vector.load %arg5[%c0_9, %c0_10] : memref<16x1xf32, #tpu.memory_space<vmem>>, vector<16x1xf32>
    %12 = vector.broadcast %11 : vector<16x1xf32> to vector<16x8xf32>
    %13 = arith.addf %10, %12 : vector<16x8xf32>
    %cst_11 = arith.constant 0.000000e+00 : f32
    %14 = vector.broadcast %cst_11 : f32 to vector<16x8xf32>
    %15 = arith.maximumf %13, %14 : vector<16x8xf32>
    %c0_12 = arith.constant 0 : index
    %c0_13 = arith.constant 0 : index
    %16 = vector.load %arg6[%c0_12, %c0_13] : memref<3x16xf32, #tpu.memory_space<vmem>>, vector<3x16xf32>
    %cst_14 = arith.constant dense<0.000000e+00> : vector<3x8xf32>
    %17 = tpu.matmul %16, %15, %cst_14 {dimension_numbers = #tpu.dot_dimension_numbers<[1], [0], [0], [1], [0, 0, 1, 1], [], []>} : vector<3x16xf32>, vector<16x8xf32>, vector<3x8xf32> -> vector<3x8xf32>
    %c0_15 = arith.constant 0 : index
    %c0_16 = arith.constant 0 : index
    %18 = vector.load %arg7[%c0_15, %c0_16] : memref<3x1xf32, #tpu.memory_space<vmem>>, vector<3x1xf32>
    %19 = vector.broadcast %18 : vector<3x1xf32> to vector<3x8xf32>
    %20 = arith.addf %17, %19 : vector<3x8xf32>
    %c0_17 = arith.constant 0 : index
    %c0_18 = arith.constant 0 : index
    %21 = vector.load %arg8[%c0_17, %c0_18] : memref<3x8xf32, #tpu.memory_space<vmem>>, vector<3x8xf32>
    tpu.vector_store %arg8[%c0_17, %c0_18], %20 {strides = array<i32>} : memref<3x8xf32, #tpu.memory_space<vmem>>, vector<3x8xf32>,
    return
  }
  func.func @transform_0(%arg0: i32) -> (i32, i32) {
    %c0_i32 = arith.constant 0 : i32
    %c0_i32_0 = arith.constant 0 : i32
    return %c0_i32, %arg0 : i32, i32
  }
  func.func @transform_1(%arg0: i32) -> (i32, i32) {
    %c0_i32 = arith.constant 0 : i32
    %c0_i32_0 = arith.constant 0 : i32
    %c0_i32_1 = arith.constant 0 : i32
    return %c0_i32, %c0_i32_0 : i32, i32
  }
  func.func @transform_2(%arg0: i32) -> (i32, i32) {
    %c0_i32 = arith.constant 0 : i32
    %c0_i32_0 = arith.constant 0 : i32
    %c0_i32_1 = arith.constant 0 : i32
    return %c0_i32, %c0_i32_0 : i32, i32
  }
  func.func @transform_3(%arg0: i32) -> (i32, i32) {
    %c0_i32 = arith.constant 0 : i32
    %c0_i32_0 = arith.constant 0 : i32
    %c0_i32_1 = arith.constant 0 : i32
    return %c0_i32, %c0_i32_0 : i32, i32
  }
  func.func @transform_4(%arg0: i32) -> (i32, i32) {
    %c0_i32 = arith.constant 0 : i32
    %c0_i32_0 = arith.constant 0 : i32
    %c0_i32_1 = arith.constant 0 : i32
    return %c0_i32, %c0_i32_0 : i32, i32
  }
  func.func @transform_5(%arg0: i32) -> (i32, i32) {
    %c0_i32 = arith.constant 0 : i32
    %c0_i32_0 = arith.constant 0 : i32
    %c0_i32_1 = arith.constant 0 : i32
    return %c0_i32, %c0_i32_0 : i32, i32
  }
  func.func @transform_6(%arg0: i32) -> (i32, i32) {
    %c0_i32 = arith.constant 0 : i32
    %c0_i32_0 = arith.constant 0 : i32
    %c0_i32_1 = arith.constant 0 : i32
    return %c0_i32, %c0_i32_0 : i32, i32
  }
  func.func @transform_7(%arg0: i32) -> (i32, i32) {
    %c0_i32 = arith.constant 0 : i32
    %c0_i32_0 = arith.constant 0 : i32
    return %c0_i32, %arg0 : i32, i32
  }
}

</mosaic_0001>

<llo_original>
// kernel: tpu_custom_call.1
$region0: #{tpu_custom_call.1}
  #allocation0 [shape = 'u32[]', space=smem, size = 0x4, offset = 0x4, fixed_abs, tag = 'smem constant byte address 0x4 - core index']
  #allocation1 [shape = 'u32[144,128]{1,0:T(1,128)}', space=vmem, size = 0x12000, scoped, tag = 'internal scratch']
  %s0 = inlined_call_operand.vmem [shape: bf16[12,8], index: 0, kind: input, shape index: {}]
  %s1 = inlined_call_operand.vmem [shape: f32[32,12], index: 1, kind: input, shape index: {}]
  %s2 = inlined_call_operand.vmem [shape: f32[32,1], index: 2, kind: input, shape index: {}]
  %s3 = inlined_call_operand.vmem [shape: f32[16,32], index: 3, kind: input, shape index: {}]
  %s4 = inlined_call_operand.vmem [shape: f32[16,1], index: 4, kind: input, shape index: {}]
  %s5 = inlined_call_operand.vmem [shape: f32[3,16], index: 5, kind: input, shape index: {}]
  %s6 = inlined_call_operand.vmem [shape: f32[3,1], index: 6, kind: input, shape index: {}]
  %s7 = inlined_call_operand.hbm [shape: f32[3,8], index: 7, kind: output, shape index: {}]
  %s8 = sld [smem:[#allocation0]]
  $region38: #{tpu_custom_call.1} parent=0
    _
  %s10 = ssub.s32 1, %s8
  %s11 = scalar_select 0, %s10, %s8
  $region1: #{tpu_custom_call.1} parent=0
    #allocation2 [shape = 'u8[2048]{0}', space=vmem, size = 0x800, scoped, tag = 'output window, operand 0, single buffered']
    #allocation3 [shape = 's32[1]{0}', space=sflag, size = 0x4, scoped, tag = 'scoped memory for tpu_custom_call.1']
    %12 = vsyncpa [#allocation3], 0
    // Predicated region
    $region2: #{tpu_custom_call.1} parent=1 // pred_check
      _
    $region3: #{tpu_custom_call.1} parent=1 // pred_check_branch
      %14 = sbr.rel (0) target = $region5
    $region4: #{tpu_custom_call.1} parent=1 // pred_region
      _
    $region5: #{tpu_custom_call.1} parent=1 // pred_fallthru
      _
    // Predicated region
    $region6: #{tpu_custom_call.1} parent=1 // pred_check
      _
    $region7: #{tpu_custom_call.1} parent=1 // pred_check_branch
      %16 = sbr.rel (0) target = $region9
    $region8: #{tpu_custom_call.1} parent=1 // pred_region
      _
    $region9: #{tpu_custom_call.1} parent=1 // pred_fallthru
      _
    // Predicated region
    $region10: #{tpu_custom_call.1} parent=1 // pred_check
      _
    $region11: #{tpu_custom_call.1} parent=1 // pred_check_branch
      %18 = sbr.rel (0) target = $region13
    $region12: #{tpu_custom_call.1} parent=1 // pred_region
      _
    $region13: #{tpu_custom_call.1} parent=1 // pred_fallthru
      _
    // Predicated region
    $region14: #{tpu_custom_call.1} parent=1 // pred_check
      _
    $region15: #{tpu_custom_call.1} parent=1 // pred_check_branch
      %20 = sbr.rel (0) target = $region17
    $region16: #{tpu_custom_call.1} parent=1 // pred_region
      _
    $region17: #{tpu_custom_call.1} parent=1 // pred_fallthru
      _
    // Predicated region
    $region18: #{tpu_custom_call.1} parent=1 // pred_check
      _
    $region19: #{tpu_custom_call.1} parent=1 // pred_check_branch
      %22 = sbr.rel (0) target = $region21
    $region20: #{tpu_custom_call.1} parent=1 // pred_region
      _
    $region21: #{tpu_custom_call.1} parent=1 // pred_fallthru
      _
    // Predicated region
    $region22: #{tpu_custom_call.1} parent=1 // pred_check
      _
    $region23: #{tpu_custom_call.1} parent=1 // pred_check_branch
      %24 = sbr.rel (0) target = $region25
    $region24: #{tpu_custom_call.1} parent=1 // pred_region
      _
    $region25: #{tpu_custom_call.1} parent=1 // pred_fallthru
      _
    // Predicated region
    $region26: #{tpu_custom_call.1} parent=1 // pred_check
      _
    $region27: #{tpu_custom_call.1} parent=1 // pred_check_branch
      %26 = sbr.rel (0) target = $region29
    $region28: #{tpu_custom_call.1} parent=1 // pred_region
      _
    $region29: #{tpu_custom_call.1} parent=1 // pred_fallthru
      _
    %v27 = vld [vmem:[%s0] sm:$0xf]
    %v28 = vld [vmem:[%s0 + $0x4] sm:$0x3]
    %v29 = vunpack.c.l.bf16 %v27
    %v30 = vunpack.c.l.bf16 %v28
    %v31 = vld [vmem:[%s1] sm:$0xff]
    %v32 = vld [vmem:[%s1 + $0x8] sm:$0xff]
    %v33 = vld [vmem:[%s1 + $0x10] sm:$0xff]
    %v34 = vld [vmem:[%s1 + $0x18] sm:$0xff]
    %v35 = vld [vmem:[%s2] sm:$0xff]
    %v36 = vld [vmem:[%s2 + $0x8] sm:$0xff]
    %v37 = vld [vmem:[%s2 + $0x10] sm:$0xff]
    %v38 = vld [vmem:[%s2 + $0x18] sm:$0xff]
    %40 = vset.pattern.permute.xlu0 0
    %41 = vperm.xlu0 %40, %v35
    %v42 = vpop.permute.xlu0 %41
    %45 = vset.pattern.permute.xlu0 0
    %46 = vperm.xlu0 %45, %v36
    %v47 = vpop.permute.xlu0 %46
    %50 = vset.pattern.permute.xlu0 0
    %51 = vperm.xlu0 %50, %v37
    %v52 = vpop.permute.xlu0 %51
    %55 = vset.pattern.permute.xlu0 0
    %56 = vperm.xlu0 %55, %v38
    %v57 = vpop.permute.xlu0 %56
    %vm59 = vcmask 97280
    %v61 = vsel %vm59, %v31, 0
    %v64 = vsel %vm59, %v32, 0
    %v67 = vsel %vm59, %v33, 0
    %v70 = vsel %vm59, %v34, 0
    %vm72 = vcmask 1043456
    %v74 = vsel %vm72, %v30, 0
    %76 = vmatprep.subr.mxu0 0.0
    %77 = vmatpush1.msra.mxu0 %v29
    %78 = vmatprep.subr.mxu0 0.0
    %79 = vmatpush1.msra.mxu0 %v74
    %80 = vmatprep.subr.mxu0 0.0
    %81 = vmatpush1.msra.mxu0 0.0
    %82 = vmatprep.subr.mxu0 0.0
    %83 = vmatpush1.msra.mxu0 0.0
    %84 = vmatprep.subr.mxu0 0.0
    %85 = vmatpush1.msra.mxu0 0.0
    %86 = vmatprep.subr.mxu0 0.0
    %87 = vmatpush1.msra.mxu0 0.0
    %88 = vmatprep.subr.mxu0 0.0
    %89 = vmatpush1.msra.mxu0 0.0
    %90 = vmatprep.subr.mxu0 0.0
    %91 = vmatpush1.msra.mxu0 0.0
    %92 = vmatprep.subr.mxu0 0.0
    %93 = vmatpush1.msra.mxu0 0.0
    %94 = vmatprep.subr.mxu0 0.0
    %95 = vmatpush1.msra.mxu0 0.0
    %96 = vmatprep.subr.mxu0 0.0
    %97 = vmatpush1.msra.mxu0 0.0
    %98 = vmatprep.subr.mxu0 0.0
    %99 = vmatpush1.msra.mxu0 0.0
    %100 = vmatprep.subr.mxu0 0.0
    %101 = vmatpush1.msra.mxu0 0.0
    %102 = vmatprep.subr.mxu0 0.0
    %103 = vmatpush1.msra.mxu0 0.0
    %104 = vmatprep.subr.mxu0 0.0
    %105 = vmatpush1.msra.mxu0 0.0
    %106 = vmatprep.subr.mxu0 0.0
    %107 = vmatpush1.msra.mxu0 0.0
    %108 = vmatprep.subr.mxu0 0.0
    %109 = vmatpush1.msra.mxu0 0.0
    %110 = vmatprep.subr.mxu0 0.0
    %111 = vmatpush1.msra.mxu0 0.0
    %112 = vmatprep.subr.mxu0 0.0
    %113 = vmatpush1.msra.mxu0 0.0
    %114 = vmatprep.subr.mxu0 0.0
    %115 = vmatpush1.msra.mxu0 0.0
    %116 = vmatprep.subr.mxu0 0.0
    %117 = vmatpush1.msra.mxu0 0.0
    %118 = vmatprep.subr.mxu0 0.0
    %119 = vmatpush1.msra.mxu0 0.0
    %120 = vmatprep.subr.mxu0 0.0
    %121 = vmatpush1.msra.mxu0 0.0
    %122 = vmatprep.subr.mxu0 0.0
    %123 = vmatpush1.msra.mxu0 0.0
    %124 = vmatprep.subr.mxu0 0.0
    %125 = vmatpush1.msra.mxu0 0.0
    %126 = vmatprep.subr.mxu0 0.0
    %127 = vmatpush1.msra.mxu0 0.0
    %128 = vmatprep.subr.mxu0 0.0
    %129 = vmatpush1.msra.mxu0 0.0
    %130 = vmatprep.subr.mxu0 0.0
    %131 = vmatpush1.msra.mxu0 0.0
    %132 = vmatprep.subr.mxu0 0.0
    %133 = vmatpush1.msra.mxu0 0.0
    %134 = vmatprep.subr.mxu0 0.0
    %135 = vmatpush1.msra.mxu0 0.0
    %136 = vmatprep.subr.mxu0 0.0
    %137 = vmatpush1.msra.mxu0 0.0
    %138 = vmatprep.subr.mxu0 0.0
    %139 = vmatpush1.msra.mxu0 0.0
    %140 = vmatprep.mubr.f32.mxu0 0.0
    %141 = vmatmul.mubr.f32.gmra.mrb[0].mxu0 %v61
    %v142 = vpop.f32.mrb[0].mxu0
    %v143 = vadd.f32 %v42, %v142
    %v144 = vpop.f32.mrb[0].mxu0
    %145 = vmatprep.mubr.f32.mxu0 0.0
    %146 = vmatmul.mubr.f32.gmra.mrb[0].mxu0 %v64
    %v147 = vpop.f32.mrb[0].mxu0
    %v148 = vadd.f32 %v47, %v147
    %v149 = vpop.f32.mrb[0].mxu0
    %150 = vmatprep.mubr.f32.mxu0 0.0
    %151 = vmatmul.mubr.f32.gmra.mrb[0].mxu0 %v67
    %v152 = vpop.f32.mrb[0].mxu0
    %v153 = vadd.f32 %v52, %v152
    %v154 = vpop.f32.mrb[0].mxu0
    %155 = vmatprep.mubr.f32.mxu0 0.0
    %156 = vmatmul.mubr.f32.gmra.mrb[0].mxu0 %v70
    %v157 = vpop.f32.mrb[0].mxu0
    %v158 = vadd.f32 %v57, %v157
    %v159 = vpop.f32.mrb[0].mxu0
    %160 = vdwg.mxu0
    %v161 = vmax.f32 %v143, 0.0
    %v162 = vmax.f32 %v148, 0.0
    %v163 = vmax.f32 %v153, 0.0
    %v164 = vmax.f32 %v158, 0.0
    %v165 = vld [vmem:[%s3] sm:$0xff]
    %v166 = vld [vmem:[%s3 + $0x8] sm:$0xff]
    %v167 = vld [vmem:[%s4] sm:$0xff]
    %v168 = vld [vmem:[%s4 + $0x8] sm:$0xff]
    %170 = vset.pattern.permute.xlu0 0
    %171 = vperm.xlu0 %170, %v167
    %v172 = vpop.permute.xlu0 %171
    %175 = vset.pattern.permute.xlu0 0
    %176 = vperm.xlu0 %175, %v168
    %v177 = vpop.permute.xlu0 %176
    %vm179 = vcmask 261120
    %v181 = vsel %vm179, %v165, 0
    %v184 = vsel %vm179, %v166, 0
    %186 = vmatprep.subr.mxu0 0.0
    %187 = vmatpush1.msra.mxu0 %v161
    %188 = vmatprep.subr.mxu0 0.0
    %189 = vmatpush1.msra.mxu0 %v162
    %190 = vmatprep.subr.mxu0 0.0
    %191 = vmatpush1.msra.mxu0 %v163
    %192 = vmatprep.subr.mxu0 0.0
    %193 = vmatpush1.msra.mxu0 %v164
    %194 = vmatprep.subr.mxu0 0.0
    %195 = vmatpush1.msra.mxu0 0.0
    %196 = vmatprep.subr.mxu0 0.0
    %197 = vmatpush1.msra.mxu0 0.0
    %198 = vmatprep.subr.mxu0 0.0
    %199 = vmatpush1.msra.mxu0 0.0
    %200 = vmatprep.subr.mxu0 0.0
    %201 = vmatpush1.msra.mxu0 0.0
    %202 = vmatprep.subr.mxu0 0.0
    %203 = vmatpush1.msra.mxu0 0.0
    %204 = vmatprep.subr.mxu0 0.0
    %205 = vmatpush1.msra.mxu0 0.0
    %206 = vmatprep.subr.mxu0 0.0
    %207 = vmatpush1.msra.mxu0 0.0
    %208 = vmatprep.subr.mxu0 0.0
    %209 = vmatpush1.msra.mxu0 0.0
    %210 = vmatprep.subr.mxu0 0.0
    %211 = vmatpush1.msra.mxu0 0.0
    %212 = vmatprep.subr.mxu0 0.0
    %213 = vmatpush1.msra.mxu0 0.0
    %214 = vmatprep.subr.mxu0 0.0
    %215 = vmatpush1.msra.mxu0 0.0
    %216 = vmatprep.subr.mxu0 0.0
    %217 = vmatpush1.msra.mxu0 0.0
    %218 = vmatprep.subr.mxu0 0.0
    %219 = vmatpush1.msra.mxu0 0.0
    %220 = vmatprep.subr.mxu0 0.0
    %221 = vmatpush1.msra.mxu0 0.0
    %222 = vmatprep.subr.mxu0 0.0
    %223 = vmatpush1.msra.mxu0 0.0
    %224 = vmatprep.subr.mxu0 0.0
    %225 = vmatpush1.msra.mxu0 0.0
    %226 = vmatprep.subr.mxu0 0.0
    %227 = vmatpush1.msra.mxu0 0.0
    %228 = vmatprep.subr.mxu0 0.0
    %229 = vmatpush1.msra.mxu0 0.0
    %230 = vmatprep.subr.mxu0 0.0
    %231 = vmatpush1.msra.mxu0 0.0
    %232 = vmatprep.subr.mxu0 0.0
    %233 = vmatpush1.msra.mxu0 0.0
    %234 = vmatprep.subr.mxu0 0.0
    %235 = vmatpush1.msra.mxu0 0.0
    %236 = vmatprep.subr.mxu0 0.0
    %237 = vmatpush1.msra.mxu0 0.0
    %238 = vmatprep.subr.mxu0 0.0
    %239 = vmatpush1.msra.mxu0 0.0
    %240 = vmatprep.subr.mxu0 0.0
    %241 = vmatpush1.msra.mxu0 0.0
    %242 = vmatprep.subr.mxu0 0.0
    %243 = vmatpush1.msra.mxu0 0.0
    %244 = vmatprep.subr.mxu0 0.0
    %245 = vmatpush1.msra.mxu0 0.0
    %246 = vmatprep.subr.mxu0 0.0
    %247 = vmatpush1.msra.mxu0 0.0
    %248 = vmatprep.subr.mxu0 0.0
    %249 = vmatpush1.msra.mxu0 0.0
    %250 = vmatprep.mubr.f32.mxu0 0.0
    %251 = vmatmul.mubr.f32.gmra.mrb[0].mxu0 %v181
    %v252 = vpop.f32.mrb[0].mxu0
    %v253 = vadd.f32 %v172, %v252
    %v254 = vpop.f32.mrb[0].mxu0
    %255 = vmatprep.mubr.f32.mxu0 0.0
    %256 = vmatmul.mubr.f32.gmra.mrb[0].mxu0 %v184
    %v257 = vpop.f32.mrb[0].mxu0
    %v258 = vadd.f32 %v177, %v257
    %v259 = vpop.f32.mrb[0].mxu0
    %260 = vdwg.mxu0
    %v261 = vmax.f32 %v253, 0.0
    %v262 = vmax.f32 %v258, 0.0
    %v263 = vld [vmem:[%s5] sm:$0x7]
    %v264 = vld [vmem:[%s6] sm:$0x7]
    %266 = vset.pattern.permute.xlu0 0
    %267 = vperm.xlu0 %266, %v264
    %v268 = vpop.permute.xlu0 %267
    %vm270 = vcmask 130048
    %v272 = vsel %vm270, %v263, 0
    %274 = vmatprep.subr.mxu0 0.0
    %275 = vmatpush1.msra.mxu0 %v261
    %276 = vmatprep.subr.mxu0 0.0
    %277 = vmatpush1.msra.mxu0 %v262
    %278 = vmatprep.subr.mxu0 0.0
    %279 = vmatpush1.msra.mxu0 0.0
    %280 = vmatprep.subr.mxu0 0.0
    %281 = vmatpush1.msra.mxu0 0.0
    %282 = vmatprep.subr.mxu0 0.0
    %283 = vmatpush1.msra.mxu0 0.0
    %284 = vmatprep.subr.mxu0 0.0
    %285 = vmatpush1.msra.mxu0 0.0
    %286 = vmatprep.subr.mxu0 0.0
    %287 = vmatpush1.msra.mxu0 0.0
    %288 = vmatprep.subr.mxu0 0.0
    %289 = vmatpush1.msra.mxu0 0.0
    %290 = vmatprep.subr.mxu0 0.0
    %291 = vmatpush1.msra.mxu0 0.0
    %292 = vmatprep.subr.mxu0 0.0
    %293 = vmatpush1.msra.mxu0 0.0
    %294 = vmatprep.subr.mxu0 0.0
    %295 = vmatpush1.msra.mxu0 0.0
    %296 = vmatprep.subr.mxu0 0.0
    %297 = vmatpush1.msra.mxu0 0.0
    %298 = vmatprep.subr.mxu0 0.0
    %299 = vmatpush1.msra.mxu0 0.0
    %300 = vmatprep.subr.mxu0 0.0
    %301 = vmatpush1.msra.mxu0 0.0
    %302 = vmatprep.subr.mxu0 0.0
    %303 = vmatpush1.msra.mxu0 0.0
    %304 = vmatprep.subr.mxu0 0.0
    %305 = vmatpush1.msra.mxu0 0.0
    %306 = vmatprep.subr.mxu0 0.0
    %307 = vmatpush1.msra.mxu0 0.0
    %308 = vmatprep.subr.mxu0 0.0
    %309 = vmatpush1.msra.mxu0 0.0
    %310 = vmatprep.subr.mxu0 0.0
    %311 = vmatpush1.msra.mxu0 0.0
    %312 = vmatprep.subr.mxu0 0.0
    %313 = vmatpush1.msra.mxu0 0.0
    %314 = vmatprep.subr.mxu0 0.0
    %315 = vmatpush1.msra.mxu0 0.0
    %316 = vmatprep.subr.mxu0 0.0
    %317 = vmatpush1.msra.mxu0 0.0
    %318 = vmatprep.subr.mxu0 0.0
    %319 = vmatpush1.msra.mxu0 0.0
    %320 = vmatprep.subr.mxu0 0.0
    %321 = vmatpush1.msra.mxu0 0.0
    %322 = vmatprep.subr.mxu0 0.0
    %323 = vmatpush1.msra.mxu0 0.0
    %324 = vmatprep.subr.mxu0 0.0
    %325 = vmatpush1.msra.mxu0 0.0
    %326 = vmatprep.subr.mxu0 0.0
    %327 = vmatpush1.msra.mxu0 0.0
    %328 = vmatprep.subr.mxu0 0.0
    %329 = vmatpush1.msra.mxu0 0.0
    %330 = vmatprep.subr.mxu0 0.0
    %331 = vmatpush1.msra.mxu0 0.0
    %332 = vmatprep.subr.mxu0 0.0
    %333 = vmatpush1.msra.mxu0 0.0
    %334 = vmatprep.subr.mxu0 0.0
    %335 = vmatpush1.msra.mxu0 0.0
    %336 = vmatprep.subr.mxu0 0.0
    %337 = vmatpush1.msra.mxu0 0.0
    %338 = vmatprep.mubr.f32.mxu0 0.0
    %339 = vmatmul.mubr.f32.gmra.mrb[0].mxu0 %v272
    %v340 = vpop.f32.mrb[0].mxu0
    %v341 = vadd.f32 %v268, %v340
    %v342 = vpop.f32.mrb[0].mxu0
    %343 = vdwg.mxu0
    %vm344 = vcmask 59392
    %345 = vst.msk [vmem:[#allocation2] sm:$0x7] %vm344, %v341
    // Predicated region
    $region30: #{tpu_custom_call.1} parent=1 // pred_check
      _
    $region31: #{tpu_custom_call.1} parent=1 // pred_check_branch
      %347 = sbr.rel (0) target = $region33
    $region32: #{tpu_custom_call.1} parent=1 // pred_region
      %s349 = ssub.s32 64, 64
      %350 = vsyncadd [#allocation3], %s349
      %s352 = sshll.u32 [#allocation2], 4
      %s353 = int_to_ptr.vmem [resolvable:$true] %s352
      %355 = dma.vmem_to_hbm [thread:$0]  %s353, 64, %s7, [#allocation3]
    $region33: #{tpu_custom_call.1} parent=1 // pred_fallthru
      _
    // Predicated region
    $region34: #{tpu_custom_call.1} parent=1 // pred_check
      _
    $region35: #{tpu_custom_call.1} parent=1 // pred_check_branch
      %357 = sbr.rel (0) target = $region37
    $region36: #{tpu_custom_call.1} parent=1 // pred_region
      %358 = dma.done [#allocation3], 64
    $region37: #{tpu_custom_call.1} parent=1 // pred_fallthru
      _
    %359 = vsyncpa [#allocation3], 1

</llo_original>
